<compile_context>
chip_gen: v7x
topology: tpu7x:2x2x1
jax: 0.10.0
libtpu: 0.0.40
codegen_flags: <defaults>
</compile_context>

<pallas_src>
import functools
import math

import jax
import jax.numpy as jnp
from jax.experimental import pallas as pl
from jax.experimental.pallas import tpu as pltpu

MIN_NORM = 1e-15
EPS_F32 = 4e-3                # PoincareBall.eps[torch.float32]
ARTANH_CLIP = 1.0 - 1e-7      # f32-representable clamp (1 - 1e-15 rounds to 1.0 in f32)


def _round_up(x, m):
    return (x + m - 1) // m * m


def _pick_tile(n, candidates):
    for c in candidates:
        if c <= n and n % c == 0:
            return c
    return n


# ---------------- host-side Poincare math (wrapper glue + pure-JAX reference) ----------------
def _artanh(x):
    x = jnp.clip(x, -ARTANH_CLIP, ARTANH_CLIP)
    return 0.5 * jnp.log((1.0 + x) / (1.0 - x))


def _rownorm(x):
    return jnp.maximum(jnp.sqrt(jnp.sum(x * x, axis=-1, keepdims=True)), MIN_NORM)


def _proj(x, c):
    norm = _rownorm(x)
    maxnorm = (1.0 - EPS_F32) / math.sqrt(c)
    return jnp.where(norm > maxnorm, x / norm * maxnorm, x)


def _expmap0(u, c):
    sqrt_c = math.sqrt(c)
    u_norm = _rownorm(u)
    return jnp.tanh(sqrt_c * u_norm) * u / (sqrt_c * u_norm)


def _logmap0(p, c):
    sqrt_c = math.sqrt(c)
    p_norm = _rownorm(p)
    return _artanh(sqrt_c * p_norm) * p / (sqrt_c * p_norm)


def _mobius_add(x, y, c):
    x2 = jnp.sum(x * x, axis=-1, keepdims=True)
    y2 = jnp.sum(y * y, axis=-1, keepdims=True)
    xy = jnp.sum(x * y, axis=-1, keepdims=True)
    num = (1.0 + 2.0 * c * xy + c * y2) * x + (1.0 - c * x2) * y
    denom = 1.0 + 2.0 * c * xy + c * c * x2 * y2
    return num / jnp.maximum(denom, MIN_NORM)


# -------------------------------- in-kernel fused helpers --------------------------------
def _expmap0_proj_k(u, c):
    """Fused proj(expmap0(u, c), c). Returns (result, analytic row norm of result)."""
    sqrt_c = math.sqrt(c)
    u_norm = jnp.maximum(jnp.sqrt(jnp.sum(u * u, axis=-1, keepdims=True)), MIN_NORM)
    # ||expmap0(u)|| = tanh(sqrt_c*||u||)/sqrt_c ; proj clips that at (1-eps)/sqrt_c.
    t = jnp.minimum(jnp.tanh(sqrt_c * u_norm), 1.0 - EPS_F32)
    res = t * pl.reciprocal(sqrt_c * u_norm, approx=True) * u
    return res, t / sqrt_c


# ---------------------- phase 1: xt = logmap0(HypLinear(x)), row tiled ----------------------
def hyplinear_logmap_kernel(x_ref, wt_ref, hb_ref, xt_ref, *, c_in):
    # TODO(synk): F.dropout on the weight is identity in eval mode / dropout=0, so it is omitted.
    sqrt_c = math.sqrt(c_in)
    max_tanh = 1.0 - EPS_F32
    maxnorm = max_tanh / sqrt_c

    x = x_ref[...]            # (tm, Fin_p)  f32
    hb = hb_ref[...]          # (1, Fout_p)  f32  == proj(expmap0(bias))  (hoisted to wrapper)

    # ---- mobius_matvec(W, x) fused with the following proj (analytic norm reuse) ----
    # Norms in f32; MXU fed with bf16 operands (weight panel is already bf16).
    x_norm = jnp.maximum(jnp.sqrt(jnp.sum(x * x, axis=-1, keepdims=True)), MIN_NORM)
    mx = jnp.dot(x.astype(jnp.bfloat16), wt_ref[...],
                 preferred_element_type=jnp.float32)                     # (tm, Fout_p) f32
    mx_norm = jnp.maximum(jnp.sqrt(jnp.sum(mx * mx, axis=-1, keepdims=True)), MIN_NORM)
    arg = mx_norm * pl.reciprocal(x_norm, approx=True) * _artanh(sqrt_c * x_norm)
    t = jnp.minimum(jnp.tanh(arg), max_tanh)                             # proj folded in
    zero_row = mx_norm <= MIN_NORM                                       # replaces all(mx == 0)
    scale = jnp.where(zero_row, 0.0, t * pl.reciprocal(sqrt_c * mx_norm, approx=True))
    res = scale * mx                                                     # = proj(mobius_matvec)
    res_sq = jnp.where(zero_row, 0.0, (t / sqrt_c) ** 2)                 # analytic ||res||^2

    # ---- mobius_add(res, hyp_bias, c_in); exact divide on the (tm,1) denominator ----
    y2 = jnp.sum(hb * hb, axis=-1, keepdims=True)                        # (1, 1)
    xy = jnp.sum(res * hb, axis=-1, keepdims=True)                       # (tm, 1)
    num = (1.0 + 2.0 * c_in * xy + c_in * y2) * res + (1.0 - c_in * res_sq) * hb
    denom = jnp.maximum(1.0 + 2.0 * c_in * xy + (c_in * c_in) * res_sq * y2, MIN_NORM)
    added = num * (1.0 / denom)

    # ---- proj then logmap0, sharing one row norm; exact divide on the logmap scale ----
    a_norm = jnp.maximum(jnp.sqrt(jnp.sum(added * added, axis=-1, keepdims=True)), MIN_NORM)
    p = jnp.where(a_norm > maxnorm,
                  added * (maxnorm * pl.reciprocal(a_norm, approx=True)),
                  added)
    p_norm = jnp.minimum(a_norm, maxnorm)                                # analytic ||p||
    log_scale = _artanh(sqrt_c * p_norm) / (sqrt_c * p_norm)
    xt_ref[...] = (log_scale * p).astype(xt_ref.dtype)


# ------------- phase 2: out = HypAct(proj(expmap0(adj @ xt))), (rows, K) tiled -------------
def agg_act_kernel(adj_ref, xt_ref, out_ref, acc_ref, *, c_in, c_out, xt_resident):
    k = pl.program_id(1)

    @pl.when(k == 0)
    def _():
        acc_ref[...] = jnp.zeros_like(acc_ref)

    if xt_resident:
        # xt is the whole (n_pad, Fout_p) slab, DMA'd once; slice the current K panel.
        tk = adj_ref.shape[1]
        start = pl.multiple_of(k * tk, tk)
        xt_blk = xt_ref[pl.ds(start, tk), :]
    else:
        xt_blk = xt_ref[...]
    acc_ref[...] += jnp.dot(adj_ref[...], xt_blk, preferred_element_type=jnp.float32)

    @pl.when(k == pl.num_programs(1) - 1)
    def _():
        support = acc_ref[...]                                           # (tm, Fout_p) f32
        # HypAgg tail: h = proj(expmap0(support, c_in), c_in)
        h, h_norm = _expmap0_proj_k(support, c_in)
        # HypAct: relu(logmap0(h, c_in)) using the analytic ||h|| (exact divide, (tm,1))
        sqrt_ci = math.sqrt(c_in)
        log_scale = _artanh(sqrt_ci * h_norm) / (sqrt_ci * h_norm)
        xt2 = jnp.maximum(log_scale * h, 0.0)
        # proj_tan0 is identity on the ball; then proj(expmap0(xt2, c_out), c_out)
        out, _ = _expmap0_proj_k(xt2, c_out)
        out_ref[...] = out.astype(out_ref.dtype)


# ----------------------------------------- wrapper -----------------------------------------
def hyperbolic_graph_conv(x, adj, weight, bias, c_in, c_out):
    N, f_in = x.shape
    f_out = weight.shape[0]
    f32 = jnp.float32
    bf16 = jnp.bfloat16

    fin_p = _round_up(f_in, 128)
    fout_p = _round_up(f_out, 128)
    n_pad = _round_up(N, 128)          # 128-granular padding bounds the pad waste

    # Keep xt fully VMEM-resident in phase 2 whenever its bf16 slab fits a v7x-safe budget.
    xt_bytes = n_pad * fout_p * 2
    xt_resident = xt_bytes <= 24 * 1024 * 1024

    # Largest tiles that divide n_pad (big tiles amortize per-step overhead and give >=1 MiB
    # adj DMAs; also cut the xt re-fetch factor in the non-resident fallback).
    tm = _pick_tile(n_pad, (512, 256, 128))
    tk = _pick_tile(n_pad, (2048, 1024, 512, 256, 128))
    # Ensure >=2 row programs so the "parallel" row axis feeds both v7x TensorCores.
    if n_pad // tm < 2 and tm >= 128:
        tm //= 2

    # Lane-dense zero-padded operands.  adj is the dominant HBM stream -> bf16.  If the caller
    # already supplies adj pre-padded in bf16 (zero outside [:N,:N]) we skip the pad/cast pass.
    if adj.shape == (n_pad, n_pad) and adj.dtype == bf16:
        adjp = adj
    else:
        adjp = jnp.zeros((n_pad, n_pad), bf16).at[:N, :N].set(adj.astype(bf16))
    xp = jnp.zeros((n_pad, fin_p), f32).at[:N, :f_in].set(x.astype(f32))
    # bf16 weight panel: MXU-fast and half the resident VMEM (norm math stays f32 in-kernel).
    wtp = jnp.zeros((fin_p, fout_p), bf16).at[:f_in, :f_out].set(weight.T.astype(bf16))

    # hyp_bias is input independent -> hoisted out of the kernel
    hb = _proj(_expmap0(bias.reshape(1, -1).astype(f32), c_in), c_in)
    hbp = jnp.zeros((1, fout_p), f32).at[:, :f_out].set(hb)

    def _vmem_limit(need_bytes):
        # generation-aware cap: plenty of headroom on v5e/v6e (128 MiB), stay <=48 MiB for v7x
        return int(min(max(need_bytes * 3 // 2, 32 * 1024 * 1024), 48 * 1024 * 1024))

    # ---- phase 1 ----
    p1_need = (fin_p * fout_p * 2          # weight panel, single-buffered, bf16
               + 2 * tm * fin_p * 4        # x tiles (double-buffered)
               + 2 * tm * fout_p * 2       # xt output tiles
               + fout_p * 4)               # hyp_bias
    xt = pl.pallas_call(
        functools.partial(hyplinear_logmap_kernel, c_in=float(c_in)),
        out_shape=jax.ShapeDtypeStruct((n_pad, fout_p), bf16),
        grid=(n_pad // tm,),
        in_specs=[
            pl.BlockSpec((tm, fin_p), lambda i: (i, 0)),
            # grid-invariant operands: single buffer (halves weight VMEM; key on v7x's 64 MiB)
            pl.BlockSpec((fin_p, fout_p), lambda i: (0, 0), pipeline_mode=pl.Buffered(1)),
            pl.BlockSpec((1, fout_p), lambda i: (0, 0), pipeline_mode=pl.Buffered(1)),
        ],
        out_specs=pl.BlockSpec((tm, fout_p), lambda i: (i, 0)),
        compiler_params=pltpu.CompilerParams(
            dimension_semantics=("parallel",),
            vmem_limit_bytes=_vmem_limit(p1_need)),
        cost_estimate=pl.CostEstimate(
            flops=2 * n_pad * fin_p * fout_p,
            transcendentals=8 * n_pad,
            bytes_accessed=4 * n_pad * fin_p + 2 * fin_p * fout_p + 2 * n_pad * fout_p),
    )(xp, wtp, hbp)

    # ---- phase 2 ----
    row_tiles = n_pad // tm
    k_tiles = n_pad // tk
    if xt_resident:
        # whole xt slab resident in VMEM (constant index map, single buffer): no per-row-tile
        # re-streaming from HBM.
        xt_spec = pl.BlockSpec((n_pad, fout_p), lambda i, k: (0, 0),
                               pipeline_mode=pl.Buffered(1))
        xt_read_bytes = 2 * n_pad * fout_p
        xt_vmem = xt_bytes
    else:
        xt_spec = pl.BlockSpec((tk, fout_p), lambda i, k: (k, 0))
        xt_read_bytes = 2 * n_pad * fout_p * row_tiles
        xt_vmem = 2 * tk * fout_p * 2

    # triple-buffer adj (when the grid is long enough) so the EUP-heavy last-k epilogue does
    # not expose DMA latency at row-tile boundaries.
    adj_buffers = 3 if row_tiles * k_tiles >= 3 else 2
    adj_spec = pl.BlockSpec((tm, tk), lambda i, k: (i, k),
                            pipeline_mode=pl.Buffered(adj_buffers))

    p2_need = (xt_vmem
               + adj_buffers * tm * tk * 2     # adj tiles
               + tm * fout_p * 4               # accumulator
               + 2 * tm * fout_p * 4)          # output tiles
    out = pl.pallas_call(
        functools.partial(agg_act_kernel, c_in=float(c_in), c_out=float(c_out),
                          xt_resident=xt_resident),
        out_shape=jax.ShapeDtypeStruct((n_pad, fout_p), f32),
        grid=(row_tiles, k_tiles),
        in_specs=[adj_spec, xt_spec],
        out_specs=pl.BlockSpec((tm, fout_p), lambda i, k: (i, 0)),
        scratch_shapes=[pltpu.VMEM((tm, fout_p), jnp.float32)],
        compiler_params=pltpu.CompilerParams(
            dimension_semantics=("parallel", "arbitrary"),
            vmem_limit_bytes=_vmem_limit(p2_need)),
        cost_estimate=pl.CostEstimate(
            flops=2 * n_pad * n_pad * fout_p,
            transcendentals=6 * n_pad,
            bytes_accessed=2 * n_pad * n_pad + xt_read_bytes + 4 * n_pad * fout_p),
    )(adjp, xt)

    return out[:N, :f_out]


# ----------------------------------- pure-JAX reference -----------------------------------
def _reference_forward(x, adj, weight, bias, c_in, c_out):
    sqrt_c = math.sqrt(c_in)
    x_norm = _rownorm(x)
    mx = x @ weight.T
    mx_norm = _rownorm(mx)
    res_c = jnp.tanh(mx_norm / x_norm * _artanh(sqrt_c * x_norm)) * mx / (mx_norm * sqrt_c)
    zero_row = jnp.all(mx == 0.0, axis=-1, keepdims=True)
    mv = jnp.where(zero_row, jnp.zeros_like(res_c), res_c)
    res = _proj(mv, c_in)
    hyp_bias = _proj(_expmap0(bias.reshape(1, -1), c_in), c_in)
    res = _proj(_mobius_add(res, hyp_bias, c_in), c_in)
    xt = _logmap0(res, c_in)
    support = adj @ xt
    h = _proj(_expmap0(support, c_in), c_in)
    xt2 = jnp.maximum(_logmap0(h, c_in), 0.0)
    return _proj(_expmap0(xt2, c_out), c_out)


# ----------------------------------------- driver -----------------------------------------
if __name__ == "__main__":
    N, F_IN, F_OUT = 16, 32, 32
    C_IN, C_OUT = 1.0, 1.0

    key = jax.random.PRNGKey(0)
    k_w, k_b, k_x, k_a = jax.random.split(key, 4)

    # HypLinear params: xavier_uniform_(weight, gain=sqrt(2)); small nonzero bias to
    # exercise the mobius_add path (reset_parameters would use bias = 0).
    gain = math.sqrt(2.0)
    bound = gain * math.sqrt(6.0 / (F_IN + F_OUT))
    weight = jax.random.uniform(k_w, (F_OUT, F_IN), jnp.float32, -bound, bound)
    bias = 0.05 * jax.random.normal(k_b, (F_OUT,), jnp.float32)

    # node features: points on the Poincare ball
    tangent = 0.1 * jax.random.normal(k_x, (N, F_IN), jnp.float32)
    x = _proj(_expmap0(tangent, C_IN), C_IN)

    # dense symmetrically-normalized adjacency with self loops
    logits = jax.random.uniform(k_a, (N, N), jnp.float32)
    a = (logits + logits.T > 1.2).astype(jnp.float32)
    a = a + jnp.eye(N, dtype=jnp.float32)
    deg = jnp.sum(a, axis=1)
    d_inv_sqrt = jnp.where(deg > 0, 1.0 / jnp.sqrt(deg), 0.0)
    adj = d_inv_sqrt[:, None] * a * d_inv_sqrt[None, :]

    out = hyperbolic_graph_conv(x, adj, weight, bias, C_IN, C_OUT)
    out = jax.block_until_ready(out)

    ref = _reference_forward(x, adj, weight, bias, C_IN, C_OUT)
    err = float(jnp.max(jnp.abs(out - ref)))

    assert out.shape == (N, F_OUT)
    assert bool(jnp.all(jnp.isfinite(out)))
    assert err < 2e-2, f"max abs diff vs reference too large: {err}"
    print("KERNEL_OK")
</pallas_src>

<mosaic_0001>
module attributes {stable_mosaic.version = 11 : i64} {
  func.func @hyplinear_logmap_kernel(%arg0: i32, %arg1: memref<64x128xf32, #tpu.memory_space<vmem>>, %arg2: memref<128x128xbf16, #tpu.memory_space<vmem>>, %arg3: memref<1x128xf32, #tpu.memory_space<vmem>>, %arg4: memref<64x128xbf16, #tpu.memory_space<vmem>>) attributes {dimension_semantics = [#tpu.dimension_semantics<parallel>], iteration_bounds = array<i64: 2>, scalar_prefetch = 0 : i64, scratch_operands = 0 : i64, tpu.core_type = #tpu.core_type<tc>, window_params = [{transform_indices = @transform_0, window_bounds = array<i64: 64, 128>}, {pipeline_mode = #tpu.pipeline_mode<synchronous>, transform_indices = @transform_1, window_bounds = array<i64: 128, 128>}, {pipeline_mode = #tpu.pipeline_mode<synchronous>, transform_indices = @transform_2, window_bounds = array<i64: 1, 128>}, {transform_indices = @transform_3, window_bounds = array<i64: 64, 128>}]} {
    %c0 = arith.constant 0 : index
    %c0_0 = arith.constant 0 : index
    %0 = vector.load %arg1[%c0, %c0_0] : memref<64x128xf32, #tpu.memory_space<vmem>>, vector<64x128xf32>
    %c0_1 = arith.constant 0 : index
    %c0_2 = arith.constant 0 : index
    %1 = vector.load %arg3[%c0_1, %c0_2] : memref<1x128xf32, #tpu.memory_space<vmem>>, vector<1x128xf32>
    %2 = arith.mulf %0, %0 : vector<64x128xf32>
    %cst = arith.constant dense<0.000000e+00> : vector<64xf32>
    %3 = vector.multi_reduction <add>, %2, %cst [1] : vector<64x128xf32> to vector<64xf32>
    %4 = vector.shape_cast %3 : vector<64xf32> to vector<64x1xf32>
    %5 = math.sqrt %4 : vector<64x1xf32>
    %cst_3 = arith.constant 1.000000e-15 : f32
    %6 = vector.broadcast %cst_3 : f32 to vector<64x1xf32>
    %7 = arith.maximumf %5, %6 : vector<64x1xf32>
    %8 = arith.truncf %0 : vector<64x128xf32> to vector<64x128xbf16>
    %c0_4 = arith.constant 0 : index
    %c0_5 = arith.constant 0 : index
    %9 = vector.load %arg2[%c0_4, %c0_5] : memref<128x128xbf16, #tpu.memory_space<vmem>>, vector<128x128xbf16>
    %cst_6 = arith.constant dense<0.000000e+00> : vector<64x128xf32>
    %10 = tpu.matmul %8, %9, %cst_6 {dimension_numbers = #tpu.dot_dimension_numbers<[1], [0], [0], [1], [0, 0, 1, 1], [], []>} : vector<64x128xbf16>, vector<128x128xbf16>, vector<64x128xf32> -> vector<64x128xf32>
    %11 = arith.mulf %10, %10 : vector<64x128xf32>
    %cst_7 = arith.constant dense<0.000000e+00> : vector<64xf32>
    %12 = vector.multi_reduction <add>, %11, %cst_7 [1] : vector<64x128xf32> to vector<64xf32>
    %13 = vector.shape_cast %12 : vector<64xf32> to vector<64x1xf32>
    %14 = math.sqrt %13 : vector<64x1xf32>
    %cst_8 = arith.constant 1.000000e-15 : f32
    %15 = vector.broadcast %cst_8 : f32 to vector<64x1xf32>
    %16 = arith.maximumf %14, %15 : vector<64x1xf32>
    %17 = tpu.reciprocal %7 {approx = true} : vector<64x1xf32> -> vector<64x1xf32>
    %18 = arith.mulf %16, %17 : vector<64x1xf32>
    %cst_9 = arith.constant 1.000000e+00 : f32
    %19 = vector.broadcast %cst_9 : f32 to vector<64x1xf32>
    %20 = arith.mulf %19, %7 : vector<64x1xf32>
    %cst_10 = arith.constant -0.99999988 : f32
    %cst_11 = arith.constant 0.99999988 : f32
    %21 = vector.broadcast %cst_10 : f32 to vector<64x1xf32>
    %22 = arith.maximumf %21, %20 : vector<64x1xf32>
    %23 = vector.broadcast %cst_11 : f32 to vector<64x1xf32>
    %24 = arith.minimumf %23, %22 : vector<64x1xf32>
    %cst_12 = arith.constant 1.000000e+00 : f32
    %25 = vector.broadcast %cst_12 : f32 to vector<64x1xf32>
    %26 = arith.addf %25, %24 : vector<64x1xf32>
    %cst_13 = arith.constant 1.000000e+00 : f32
    %27 = vector.broadcast %cst_13 : f32 to vector<64x1xf32>
    %28 = arith.subf %27, %24 : vector<64x1xf32>
    %29 = arith.divf %26, %28 : vector<64x1xf32>
    %30 = math.log %29 : vector<64x1xf32>
    %cst_14 = arith.constant 5.000000e-01 : f32
    %31 = vector.broadcast %cst_14 : f32 to vector<64x1xf32>
    %32 = arith.mulf %31, %30 : vector<64x1xf32>
    %33 = arith.mulf %18, %32 : vector<64x1xf32>
    %34 = math.tanh %33 : vector<64x1xf32>
    %cst_15 = arith.constant 0.995999991 : f32
    %35 = vector.broadcast %cst_15 : f32 to vector<64x1xf32>
    %36 = arith.minimumf %34, %35 : vector<64x1xf32>
    %cst_16 = arith.constant 1.000000e-15 : f32
    %37 = vector.broadcast %cst_16 : f32 to vector<64x1xf32>
    %38 = arith.cmpf ole, %16, %37 : vector<64x1xf32>
    %cst_17 = arith.constant 1.000000e+00 : f32
    %39 = vector.broadcast %cst_17 : f32 to vector<64x1xf32>
    %40 = arith.mulf %39, %16 : vector<64x1xf32>
    %41 = tpu.reciprocal %40 {approx = true} : vector<64x1xf32> -> vector<64x1xf32>
    %42 = arith.mulf %36, %41 : vector<64x1xf32>
    %cst_18 = arith.constant 0.000000e+00 : f32
    %43 = vector.broadcast %cst_18 : f32 to vector<64x1xf32>
    %44 = arith.select %38, %43, %42 : vector<64x1xi1>, vector<64x1xf32>
    %45 = vector.broadcast %44 : vector<64x1xf32> to vector<64x128xf32>
    %46 = arith.mulf %45, %10 : vector<64x128xf32>
    %cst_19 = arith.constant 1.000000e+00 : f32
    %47 = vector.broadcast %cst_19 : f32 to vector<64x1xf32>
    %48 = arith.divf %36, %47 : vector<64x1xf32>
    %49 = arith.mulf %48, %48 : vector<64x1xf32>
    %cst_20 = arith.constant 0.000000e+00 : f32
    %50 = vector.broadcast %cst_20 : f32 to vector<64x1xf32>
    %51 = arith.select %38, %50, %49 : vector<64x1xi1>, vector<64x1xf32>
    %52 = arith.mulf %1, %1 : vector<1x128xf32>
    %cst_21 = arith.constant dense<0.000000e+00> : vector<1xf32>
    %53 = vector.multi_reduction <add>, %52, %cst_21 [1] : vector<1x128xf32> to vector<1xf32>
    %54 = vector.shape_cast %53 : vector<1xf32> to vector<1x1xf32>
    %55 = vector.broadcast %1 : vector<1x128xf32> to vector<64x128xf32>
    %56 = arith.mulf %46, %55 : vector<64x128xf32>
    %cst_22 = arith.constant dense<0.000000e+00> : vector<64xf32>
    %57 = vector.multi_reduction <add>, %56, %cst_22 [1] : vector<64x128xf32> to vector<64xf32>
    %58 = vector.shape_cast %57 : vector<64xf32> to vector<64x1xf32>
    %cst_23 = arith.constant 2.000000e+00 : f32
    %59 = vector.broadcast %cst_23 : f32 to vector<64x1xf32>
    %60 = arith.mulf %59, %58 : vector<64x1xf32>
    %cst_24 = arith.constant 1.000000e+00 : f32
    %61 = vector.broadcast %cst_24 : f32 to vector<64x1xf32>
    %62 = arith.addf %61, %60 : vector<64x1xf32>
    %cst_25 = arith.constant 1.000000e+00 : f32
    %63 = vector.broadcast %cst_25 : f32 to vector<1x1xf32>
    %64 = arith.mulf %63, %54 : vector<1x1xf32>
    %65 = vector.broadcast %64 : vector<1x1xf32> to vector<64x1xf32>
    %66 = arith.addf %62, %65 : vector<64x1xf32>
    %67 = vector.broadcast %66 : vector<64x1xf32> to vector<64x128xf32>
    %68 = arith.mulf %67, %46 : vector<64x128xf32>
    %cst_26 = arith.constant 1.000000e+00 : f32
    %69 = vector.broadcast %cst_26 : f32 to vector<64x1xf32>
    %70 = arith.mulf %69, %51 : vector<64x1xf32>
    %cst_27 = arith.constant 1.000000e+00 : f32
    %71 = vector.broadcast %cst_27 : f32 to vector<64x1xf32>
    %72 = arith.subf %71, %70 : vector<64x1xf32>
    %73 = vector.broadcast %72 : vector<64x1xf32> to vector<64x128xf32>
    %74 = vector.broadcast %1 : vector<1x128xf32> to vector<64x128xf32>
    %75 = arith.mulf %73, %74 : vector<64x128xf32>
    %76 = arith.addf %68, %75 : vector<64x128xf32>
    %cst_28 = arith.constant 2.000000e+00 : f32
    %77 = vector.broadcast %cst_28 : f32 to vector<64x1xf32>
    %78 = arith.mulf %77, %58 : vector<64x1xf32>
    %cst_29 = arith.constant 1.000000e+00 : f32
    %79 = vector.broadcast %cst_29 : f32 to vector<64x1xf32>
    %80 = arith.addf %79, %78 : vector<64x1xf32>
    %cst_30 = arith.constant 1.000000e+00 : f32
    %81 = vector.broadcast %cst_30 : f32 to vector<64x1xf32>
    %82 = arith.mulf %81, %51 : vector<64x1xf32>
    %83 = vector.broadcast %54 : vector<1x1xf32> to vector<64x1xf32>
    %84 = arith.mulf %82, %83 : vector<64x1xf32>
    %85 = arith.addf %80, %84 : vector<64x1xf32>
    %cst_31 = arith.constant 1.000000e-15 : f32
    %86 = vector.broadcast %cst_31 : f32 to vector<64x1xf32>
    %87 = arith.maximumf %85, %86 : vector<64x1xf32>
    %cst_32 = arith.constant 1.000000e+00 : f32
    %88 = vector.broadcast %cst_32 : f32 to vector<64x1xf32>
    %89 = arith.divf %88, %87 : vector<64x1xf32>
    %90 = vector.broadcast %89 : vector<64x1xf32> to vector<64x128xf32>
    %91 = arith.mulf %76, %90 : vector<64x128xf32>
    %92 = arith.mulf %91, %91 : vector<64x128xf32>
    %cst_33 = arith.constant dense<0.000000e+00> : vector<64xf32>
    %93 = vector.multi_reduction <add>, %92, %cst_33 [1] : vector<64x128xf32> to vector<64xf32>
    %94 = vector.shape_cast %93 : vector<64xf32> to vector<64x1xf32>
    %95 = math.sqrt %94 : vector<64x1xf32>
    %cst_34 = arith.constant 1.000000e-15 : f32
    %96 = vector.broadcast %cst_34 : f32 to vector<64x1xf32>
    %97 = arith.maximumf %95, %96 : vector<64x1xf32>
    %cst_35 = arith.constant 0.995999991 : f32
    %98 = vector.broadcast %cst_35 : f32 to vector<64x1xf32>
    %99 = arith.cmpf ogt, %97, %98 : vector<64x1xf32>
    %100 = tpu.reciprocal %97 {approx = true} : vector<64x1xf32> -> vector<64x1xf32>
    %cst_36 = arith.constant 0.995999991 : f32
    %101 = vector.broadcast %cst_36 : f32 to vector<64x1xf32>
    %102 = arith.mulf %101, %100 : vector<64x1xf32>
    %103 = vector.broadcast %102 : vector<64x1xf32> to vector<64x128xf32>
    %104 = arith.mulf %91, %103 : vector<64x128xf32>
    %105 = vector.shape_cast %99 : vector<64x1xi1> to vector<64x1xi1>
    %106 = vector.broadcast %105 : vector<64x1xi1> to vector<64x128xi1>
    %107 = arith.select %106, %104, %91 : vector<64x128xi1>, vector<64x128xf32>
    %cst_37 = arith.constant 0.995999991 : f32
    %108 = vector.broadcast %cst_37 : f32 to vector<64x1xf32>
    %109 = arith.minimumf %97, %108 : vector<64x1xf32>
    %cst_38 = arith.constant 1.000000e+00 : f32
    %110 = vector.broadcast %cst_38 : f32 to vector<64x1xf32>
    %111 = arith.mulf %110, %109 : vector<64x1xf32>
    %cst_39 = arith.constant -0.99999988 : f32
    %cst_40 = arith.constant 0.99999988 : f32
    %112 = vector.broadcast %cst_39 : f32 to vector<64x1xf32>
    %113 = arith.maximumf %112, %111 : vector<64x1xf32>
    %114 = vector.broadcast %cst_40 : f32 to vector<64x1xf32>
    %115 = arith.minimumf %114, %113 : vector<64x1xf32>
    %cst_41 = arith.constant 1.000000e+00 : f32
    %116 = vector.broadcast %cst_41 : f32 to vector<64x1xf32>
    %117 = arith.addf %116, %115 : vector<64x1xf32>
    %cst_42 = arith.constant 1.000000e+00 : f32
    %118 = vector.broadcast %cst_42 : f32 to vector<64x1xf32>
    %119 = arith.subf %118, %115 : vector<64x1xf32>
    %120 = arith.divf %117, %119 : vector<64x1xf32>
    %121 = math.log %120 : vector<64x1xf32>
    %cst_43 = arith.constant 5.000000e-01 : f32
    %122 = vector.broadcast %cst_43 : f32 to vector<64x1xf32>
    %123 = arith.mulf %122, %121 : vector<64x1xf32>
    %cst_44 = arith.constant 1.000000e+00 : f32
    %124 = vector.broadcast %cst_44 : f32 to vector<64x1xf32>
    %125 = arith.mulf %124, %109 : vector<64x1xf32>
    %126 = arith.divf %123, %125 : vector<64x1xf32>
    %127 = vector.broadcast %126 : vector<64x1xf32> to vector<64x128xf32>
    %128 = arith.mulf %127, %107 : vector<64x128xf32>
    %129 = arith.truncf %128 : vector<64x128xf32> to vector<64x128xbf16>
    %c0_45 = arith.constant 0 : index
    %c0_46 = arith.constant 0 : index
    %130 = vector.load %arg4[%c0_45, %c0_46] : memref<64x128xbf16, #tpu.memory_space<vmem>>, vector<64x128xbf16>
    tpu.vector_store %arg4[%c0_45, %c0_46], %129 {strides = array<i32>} : memref<64x128xbf16, #tpu.memory_space<vmem>>, vector<64x128xbf16>,
    return
  }
  func.func @transform_0(%arg0: i32) -> (i32, i32) {
    %c0_i32 = arith.constant 0 : i32
    %c0_i32_0 = arith.constant 0 : i32
    return %arg0, %c0_i32 : i32, i32
  }
  func.func @transform_1(%arg0: i32) -> (i32, i32) {
    %c0_i32 = arith.constant 0 : i32
    %c0_i32_0 = arith.constant 0 : i32
    %c0_i32_1 = arith.constant 0 : i32
    return %c0_i32, %c0_i32_0 : i32, i32
  }
  func.func @transform_2(%arg0: i32) -> (i32, i32) {
    %c0_i32 = arith.constant 0 : i32
    %c0_i32_0 = arith.constant 0 : i32
    %c0_i32_1 = arith.constant 0 : i32
    return %c0_i32, %c0_i32_0 : i32, i32
  }
  func.func @transform_3(%arg0: i32) -> (i32, i32) {
    %c0_i32 = arith.constant 0 : i32
    %c0_i32_0 = arith.constant 0 : i32
    return %arg0, %c0_i32 : i32, i32
  }
}

</mosaic_0001>

<llo_original>
// kernel: tpu_custom_call.1
$region0: #{tpu_custom_call.1}
  #allocation0 [shape = 'u32[]', space=smem, size = 0x4, offset = 0x4, fixed_abs, tag = 'smem constant byte address 0x4 - core index']
  #allocation1 [shape = 'u32[144,128]{1,0:T(1,128)}', space=vmem, size = 0x12000, scoped, tag = 'internal scratch']
  %s0 = inlined_call_operand.hbm [shape: f32[128,128], index: 0, kind: input, shape index: {}]
  %s1 = inlined_call_operand.hbm [shape: bf16[128,128], index: 1, kind: input, shape index: {}]
  %s2 = inlined_call_operand.vmem [shape: f32[1,128], index: 2, kind: input, shape index: {}]
  %s3 = inlined_call_operand.hbm [shape: bf16[128,128], index: 3, kind: output, shape index: {}]
  %s4 = sld [smem:[#allocation0]]
  $region53: #{tpu_custom_call.1} parent=0
    _
  %s6 = ssub.s32 1, %s4
  %s7 = scalar_select 0, %s6, %s4
  $region1: #{tpu_custom_call.1} parent=0
    #allocation2 [shape = 'u8[65536]{0}', space=vmem, size = 0x10000, scoped, tag = 'input window, operand 0']
    #allocation3 [shape = 's32[2]{0}', space=sflag, size = 0x8, scoped, tag = 'scoped memory for tpu_custom_call.1']
    #allocation4 [shape = 's32[2]{0}', space=sflag, size = 0x8, scoped, tag = 'scoped memory for tpu_custom_call.1']
    #allocation5 [shape = 'u8[32768]{0}', space=vmem, size = 0x8000, scoped, tag = 'input window, operand 1, single buffered']
    #allocation6 [shape = 's32[1]{0}', space=sflag, size = 0x4, scoped, tag = 'scoped memory for tpu_custom_call.1']
    #allocation7 [shape = 'u8[32768]{0}', space=vmem, size = 0x8000, scoped, tag = 'output window, operand 0']
    %8 = vsyncpa [#allocation3], 0
    %s9 = scalar_lea.sflag [#allocation3], 1
    %10 = vsyncpa %s9, 0
    %11 = vsyncpa [#allocation6], 0
    %12 = vsyncpa [#allocation4], 0
    %s13 = scalar_lea.sflag [#allocation4], 1
    %14 = vsyncpa %s13, 0
    loop: start=0, step=1, limit=4
    $region2: #{tpu_custom_call.1} parent=1 // loop_pre_header
      _
    $region3: #{tpu_custom_call.1} parent=1 // loop_header
      %s16 = sphi 0, %s20
      %p17 = scmp.ge.s32.totalorder %s16, 4
      %s26 = sphi 0, %s28
      %s29 = sphi 0, %s26
      %s30 = sphi 0, %s29
      %s46 = sphi 0, %s30
      %s50 = sphi 0, %s50
      %s52 = sphi 0, %s50
      %s53 = sphi 0, %s52
      %s67 = sphi 0, %s53
      %s71 = sphi 0, %s71
      %s73 = sphi 0, %s71
      %s74 = sphi 0, %s73
      %s88 = sphi 0, %s74
      %s94 = sphi 0, %s96
      %s97 = sphi 0, %s94
      %s98 = sphi 0, %s97
      %s114 = sphi 0, %s98
    $region4: #{tpu_custom_call.1} parent=1 // loop_header_branch
      %19 = sbr.rel (%p17) target = $region8
    $region5: #{tpu_custom_call.1} parent=1 // loop_body
      %s21 = ssub.s32 %s16, 1
      %s22 = ssub.s32 %s16, 2
      %s23 = sadd.s32 %s16, 1
      %s24 = ssub.s32 %s16, %s23
      %p25 = scmp.eq.s32.totalorder %s24, 0
      %s27 = sadd.s32 %s26, 1
      %s28 = scalar_select %p25, %s26, %s27
      %p31 = pneg %p25
      %p32 = scmp.eq.s32.totalorder %s16, 1
      %p33 = por %p31, %p32
      %p34 = scmp.ne.s32.totalorder %s26, %s29
      %p35 = scmp.eq.s32.totalorder %s16, 0
      %p36 = por %p34, %p35
      %p37 = scmp.ne.s32.totalorder %s26, %s29
      %p38 = scmp.eq.s32.totalorder %s21, 1
      %p39 = por %p37, %p38
      %p40 = scmp.ne.s32.totalorder %s29, %s30
      %p41 = scmp.eq.s32.totalorder %s21, 0
      %p42 = por %p40, %p41
      %p43 = scmp.ne.s32.totalorder %s29, %s30
      %p44 = scmp.eq.s32.totalorder %s22, 1
      %p45 = por %p43, %p44
      %p47 = scmp.ne.s32.totalorder %s30, %s46
      %p48 = scmp.eq.s32.totalorder %s22, 0
      %p49 = por %p47, %p48
      %s51 = sadd.s32 %s50, 1
      %p54 = scmp.eq.s32.totalorder %s16, 1
      %p55 = scmp.ne.s32.totalorder %s50, %s52
      %p56 = scmp.eq.s32.totalorder %s16, 0
      %p57 = por %p55, %p56
      %p58 = scmp.ne.s32.totalorder %s50, %s52
      %p59 = scmp.eq.s32.totalorder %s21, 1
      %p60 = por %p58, %p59
      %p61 = scmp.ne.s32.totalorder %s52, %s53
      %p62 = scmp.eq.s32.totalorder %s21, 0
      %p63 = por %p61, %p62
      %p64 = scmp.ne.s32.totalorder %s52, %s53
      %p65 = scmp.eq.s32.totalorder %s22, 1
      %p66 = por %p64, %p65
      %p68 = scmp.ne.s32.totalorder %s53, %s67
      %p69 = scmp.eq.s32.totalorder %s22, 0
      %p70 = por %p68, %p69
      %s72 = sadd.s32 %s71, 1
      %p75 = scmp.eq.s32.totalorder %s16, 1
      %p76 = scmp.ne.s32.totalorder %s71, %s73
      %p77 = scmp.eq.s32.totalorder %s16, 0
      %p78 = por %p76, %p77
      %p79 = scmp.ne.s32.totalorder %s71, %s73
      %p80 = scmp.eq.s32.totalorder %s21, 1
      %p81 = por %p79, %p80
      %p82 = scmp.ne.s32.totalorder %s73, %s74
      %p83 = scmp.eq.s32.totalorder %s21, 0
      %p84 = por %p82, %p83
      %p85 = scmp.ne.s32.totalorder %s73, %s74
      %p86 = scmp.eq.s32.totalorder %s22, 1
      %p87 = por %p85, %p86
      %p89 = scmp.ne.s32.totalorder %s74, %s88
      %p90 = scmp.eq.s32.totalorder %s22, 0
      %p91 = por %p89, %p90
      %s92 = ssub.s32 %s16, %s23
      %p93 = scmp.eq.s32.totalorder %s92, 0
      %s95 = sadd.s32 %s94, 1
      %s96 = scalar_select %p93, %s94, %s95
      %p99 = pneg %p93
      %p100 = scmp.eq.s32.totalorder %s16, 1
      %p101 = por %p99, %p100
      %p102 = scmp.ne.s32.totalorder %s94, %s97
      %p103 = scmp.eq.s32.totalorder %s16, 0
      %p104 = por %p102, %p103
      %p105 = scmp.ne.s32.totalorder %s94, %s97
      %p106 = scmp.eq.s32.totalorder %s21, 1
      %p107 = por %p105, %p106
      %p108 = scmp.ne.s32.totalorder %s97, %s98
      %p109 = scmp.eq.s32.totalorder %s21, 0
      %p110 = por %p108, %p109
      %p111 = scmp.ne.s32.totalorder %s97, %s98
      %p112 = scmp.eq.s32.totalorder %s22, 1
      %p113 = por %p111, %p112
      %p115 = scmp.ne.s32.totalorder %s98, %s114
      %p116 = scmp.eq.s32.totalorder %s22, 0
      %p117 = por %p115, %p116
      %p118 = scmp.le.s32.totalorder 1, %s16
      %p119 = scmp.lt.s32.totalorder %s16, 3
      %p120 = pnand %p118, %p119
      %p121 = pneg %p120
      // Predicated region
      $region9: #{tpu_custom_call.1} parent=5 // pred_check
        _
      $region10: #{tpu_custom_call.1} parent=5 // pred_check_branch
        %123 = sbr.rel (%p120) target = $region12
      $region11: #{tpu_custom_call.1} parent=5 // pred_region
        %s124 = ssub.s32 %s16, 1
        // Predicated region
        $region13: #{tpu_custom_call.1} parent=11 // pred_check
          %p125 = pneg %p63
        $region14: #{tpu_custom_call.1} parent=11 // pred_check_branch
          %127 = sbr.rel (%p125) target = $region16
        $region15: #{tpu_custom_call.1} parent=11 // pred_region
          %s129 = ssub.s32 1024, 1024
          %130 = vsyncadd [#allocation6], %s129
          %s131 = sshll.u32 [#allocation5], 4
          %s132 = int_to_ptr.vmem [resolvable:$true] %s131
          %137 = dma.hbm_to_vmem [thread:$0]  %s1, 1024, %s132, [#allocation6], 64, 64, 4
        $region16: #{tpu_custom_call.1} parent=11 // pred_fallthru
          _
        // Predicated region
        $region17: #{tpu_custom_call.1} parent=11 // pred_check
          %p138 = pneg %p84
        $region18: #{tpu_custom_call.1} parent=11 // pred_check_branch
          %140 = sbr.rel (%p138) target = $region20
        $region19: #{tpu_custom_call.1} parent=11 // pred_region
          _
        $region20: #{tpu_custom_call.1} parent=11 // pred_fallthru
          _
      $region12: #{tpu_custom_call.1} parent=5 // pred_fallthru
        _
      %p141 = scmp.lt.s32.totalorder %s16, 2
      // Predicated region
      $region21: #{tpu_custom_call.1} parent=5 // pred_check
        %p142 = pneg %p141
      $region22: #{tpu_custom_call.1} parent=5 // pred_check_branch
        %144 = sbr.rel (%p142) target = $region24
      $region23: #{tpu_custom_call.1} parent=5 // pred_region
        // Predicated region
        $region25: #{tpu_custom_call.1} parent=23 // pred_check
          %p145 = pneg %p36
        $region26: #{tpu_custom_call.1} parent=23 // pred_check_branch
          %147 = sbr.rel (%p145) target = $region28
        $region27: #{tpu_custom_call.1} parent=23 // pred_region
          %s148 = sand.u32 %s26, 1
          %s149 = scalar_lea.sflag [#allocation3], %s148
          %s150 = sand.u32 %s26, 1
          %s151 = smul.addr %s150, 64
          %s152 = scalar_lea.vmem [#allocation2], %s151
          %s153 = smul.u32 8, %s16
          %s155 = ssub.s32 1024, 1024
          %156 = vsyncadd %s149, %s155
          %s157 = smul.addr %s153, 128
          %s158 = scalar_lea.hbm %s0, %s157
          %s159 = sshll.u32 %s152, 4
          %s160 = int_to_ptr.vmem [resolvable:$true] %s159
          %165 = dma.hbm_to_vmem [thread:$0]  %s158, 1024, %s160, %s149, 128, 128, 8
        $region28: #{tpu_custom_call.1} parent=23 // pred_fallthru
          _
      $region24: #{tpu_custom_call.1} parent=5 // pred_fallthru
        _
      %p166 = scmp.le.s32.totalorder 1, %s16
      %p167 = scmp.lt.s32.totalorder %s16, 3
      %p168 = pnand %p166, %p167
      %p169 = pneg %p168
      // Predicated region
      $region29: #{tpu_custom_call.1} parent=5 // pred_check
        _
      $region30: #{tpu_custom_call.1} parent=5 // pred_check_branch
        %171 = sbr.rel (%p168) target = $region32
      $region31: #{tpu_custom_call.1} parent=5 // pred_region
        %s172 = ssub.s32 %s16, 1
        %s173 = sand.u32 %s29, 1
        %s174 = scalar_lea.sflag [#allocation3], %s173
        %s175 = sand.u32 %s29, 1
        %s176 = smul.addr %s175, 64
        %s177 = scalar_lea.vmem [#allocation2], %s176
        // Predicated region
        $region33: #{tpu_custom_call.1} parent=31 // pred_check
          %p178 = pneg %p42
        $region34: #{tpu_custom_call.1} parent=31 // pred_check_branch
          %180 = sbr.rel (%p178) target = $region36
        $region35: #{tpu_custom_call.1} parent=31 // pred_region
          %181 = dma.done %s174, 1024
        $region36: #{tpu_custom_call.1} parent=31 // pred_fallthru
          _
        // Predicated region
        $region37: #{tpu_custom_call.1} parent=31 // pred_check
          %p182 = pneg %p63
        $region38: #{tpu_custom_call.1} parent=31 // pred_check_branch
          %184 = sbr.rel (%p182) target = $region40
        $region39: #{tpu_custom_call.1} parent=31 // pred_region
          %185 = dma.done [#allocation6], 1024
        $region40: #{tpu_custom_call.1} parent=31 // pred_fallthru
          _
        %s186 = sand.u32 %s29, 1
        %s187 = scalar_lea.sflag [#allocation3], %s186
        %s188 = sand.u32 %s29, 1
        %s189 = smul.addr %s188, 64
        %s190 = scalar_lea.vmem [#allocation2], %s189
        %p191 = pneg %p42
        %p192 = pneg %p39
        %p193 = pneg %p63
        %p194 = pneg %p60
        %p195 = pneg %p84
        %p196 = pneg %p81
        %p197 = pneg %p110
        %p198 = pneg %p107
        %s199 = sand.u32 %s97, 1
        %s200 = scalar_lea.sflag [#allocation4], %s199
        %s201 = sand.u32 %s97, 1
        %s202 = smul.addr %s201, 32
        %s203 = scalar_lea.vmem [#allocation7], %s202
        %s204 = smul.u32 8, %s21
        %s205 = smul.u32 8, %s21
        %v207 = vld [vmem:[%s177] sm:$0xff]
        %v208 = vld [vmem:[%s177 + $0x8] sm:$0xff]
        %v209 = vld [vmem:[%s177 + $0x10] sm:$0xff]
        %v210 = vld [vmem:[%s177 + $0x18] sm:$0xff]
        %v211 = vld [vmem:[%s177 + $0x20] sm:$0xff]
        %v212 = vld [vmem:[%s177 + $0x28] sm:$0xff]
        %v213 = vld [vmem:[%s177 + $0x30] sm:$0xff]
        %v214 = vld [vmem:[%s177 + $0x38] sm:$0xff]
        %v215 = vld [vmem:[%s2] sm:$0x1]
        %v216 = vmul.f32 %v207, %v207
        %v217 = vmul.f32 %v208, %v208
        %v218 = vmul.f32 %v209, %v209
        %v219 = vmul.f32 %v210, %v210
        %v220 = vmul.f32 %v211, %v211
        %v221 = vmul.f32 %v212, %v212
        %v222 = vmul.f32 %v213, %v213
        %v223 = vmul.f32 %v214, %v214
        %224 = vadd.xlane.f32.xlu0 %v216
        %v225 = vpop.xlane.xlu0 %224
        %226 = vadd.xlane.f32.xlu0 %v217
        %v227 = vpop.xlane.xlu0 %226
        %228 = vadd.xlane.f32.xlu0 %v218
        %v229 = vpop.xlane.xlu0 %228
        %230 = vadd.xlane.f32.xlu0 %v219
        %v231 = vpop.xlane.xlu0 %230
        %232 = vadd.xlane.f32.xlu0 %v220
        %v233 = vpop.xlane.xlu0 %232
        %234 = vadd.xlane.f32.xlu0 %v221
        %v235 = vpop.xlane.xlu0 %234
        %236 = vadd.xlane.f32.xlu0 %v222
        %v237 = vpop.xlane.xlu0 %236
        %238 = vadd.xlane.f32.xlu0 %v223
        %v239 = vpop.xlane.xlu0 %238
        %v240 = vrsqrt.pop %v225
        %v241 = vmul.f32 %v225, %v240
        %vm242 = vcmp.eq.f32.partialorder %v225, inf
        %v243 = vsel %vm242, %v225, %v241
        %vm244 = vcmp.eq.f32.partialorder %v225, 0.0
        %v245 = vand.u32 %v225, 2147483648
        %v246 = vsel %vm244, %v245, %v243
        %v247 = vrsqrt.pop %v227
        %v248 = vmul.f32 %v227, %v247
        %vm249 = vcmp.eq.f32.partialorder %v227, inf
        %v250 = vsel %vm249, %v227, %v248
        %vm251 = vcmp.eq.f32.partialorder %v227, 0.0
        %v252 = vand.u32 %v227, 2147483648
        %v253 = vsel %vm251, %v252, %v250
        %v254 = vrsqrt.pop %v229
        %v255 = vmul.f32 %v229, %v254
        %vm256 = vcmp.eq.f32.partialorder %v229, inf
        %v257 = vsel %vm256, %v229, %v255
        %vm258 = vcmp.eq.f32.partialorder %v229, 0.0
        %v259 = vand.u32 %v229, 2147483648
        %v260 = vsel %vm258, %v259, %v257
        %v261 = vrsqrt.pop %v231
        %v262 = vmul.f32 %v231, %v261
        %vm263 = vcmp.eq.f32.partialorder %v231, inf
        %v264 = vsel %vm263, %v231, %v262
        %vm265 = vcmp.eq.f32.partialorder %v231, 0.0
        %v266 = vand.u32 %v231, 2147483648
        %v267 = vsel %vm265, %v266, %v264
        %v268 = vrsqrt.pop %v233
        %v269 = vmul.f32 %v233, %v268
        %vm270 = vcmp.eq.f32.partialorder %v233, inf
        %v271 = vsel %vm270, %v233, %v269
        %vm272 = vcmp.eq.f32.partialorder %v233, 0.0
        %v273 = vand.u32 %v233, 2147483648
        %v274 = vsel %vm272, %v273, %v271
        %v275 = vrsqrt.pop %v235
        %v276 = vmul.f32 %v235, %v275
        %vm277 = vcmp.eq.f32.partialorder %v235, inf
        %v278 = vsel %vm277, %v235, %v276
        %vm279 = vcmp.eq.f32.partialorder %v235, 0.0
        %v280 = vand.u32 %v235, 2147483648
        %v281 = vsel %vm279, %v280, %v278
        %v282 = vrsqrt.pop %v237
        %v283 = vmul.f32 %v237, %v282
        %vm284 = vcmp.eq.f32.partialorder %v237, inf
        %v285 = vsel %vm284, %v237, %v283
        %vm286 = vcmp.eq.f32.partialorder %v237, 0.0
        %v287 = vand.u32 %v237, 2147483648
        %v288 = vsel %vm286, %v287, %v285
        %v289 = vrsqrt.pop %v239
        %v290 = vmul.f32 %v239, %v289
        %vm291 = vcmp.eq.f32.partialorder %v239, inf
        %v292 = vsel %vm291, %v239, %v290
        %vm293 = vcmp.eq.f32.partialorder %v239, 0.0
        %v294 = vand.u32 %v239, 2147483648
        %v295 = vsel %vm293, %v294, %v292
        %v296 = vmax.f32 %v246, 1e-15
        %v297 = vmax.f32 %v253, 1e-15
        %v298 = vmax.f32 %v260, 1e-15
        %v299 = vmax.f32 %v267, 1e-15
        %v300 = vmax.f32 %v274, 1e-15
        %v301 = vmax.f32 %v281, 1e-15
        %v302 = vmax.f32 %v288, 1e-15
        %v303 = vmax.f32 %v295, 1e-15
        %v304 = vpack.c.bf16 %v208, %v207
        %v305 = vpack.c.bf16 %v210, %v209
        %v306 = vpack.c.bf16 %v212, %v211
        %v307 = vpack.c.bf16 %v214, %v213
        %v308 = vld [vmem:[#allocation5] sm:$0xf]
        %v309 = vld [vmem:[#allocation5 + $0x4] sm:$0xf]
        %v310 = vld [vmem:[#allocation5 + $0x8] sm:$0xf]
        %v311 = vld [vmem:[#allocation5 + $0xc] sm:$0xf]
        %v312 = vld [vmem:[#allocation5 + $0x10] sm:$0xf]
        %v313 = vld [vmem:[#allocation5 + $0x14] sm:$0xf]
        %v314 = vld [vmem:[#allocation5 + $0x18] sm:$0xf]
        %v315 = vld [vmem:[#allocation5 + $0x1c] sm:$0xf]
        %v316 = vld [vmem:[#allocation5 + $0x20] sm:$0xf]
        %v317 = vld [vmem:[#allocation5 + $0x24] sm:$0xf]
        %v318 = vld [vmem:[#allocation5 + $0x28] sm:$0xf]
        %v319 = vld [vmem:[#allocation5 + $0x2c] sm:$0xf]
        %v320 = vld [vmem:[#allocation5 + $0x30] sm:$0xf]
        %v321 = vld [vmem:[#allocation5 + $0x34] sm:$0xf]
        %v322 = vld [vmem:[#allocation5 + $0x38] sm:$0xf]
        %v323 = vld [vmem:[#allocation5 + $0x3c] sm:$0xf]
        %v340 = vunpack.c.l.b16 %v308
        %v341 = vunpack.c.l.b16 %v309
        %v342 = vunpack.c.l.b16 %v310
        %v343 = vunpack.c.l.b16 %v311
        %v344 = vunpack.c.l.b16 %v312
        %v345 = vunpack.c.l.b16 %v313
        %v346 = vunpack.c.l.b16 %v314
        %v347 = vunpack.c.l.b16 %v315
        %v348 = vunpack.c.l.b16 %v316
        %v349 = vunpack.c.l.b16 %v317
        %v350 = vunpack.c.l.b16 %v318
        %v351 = vunpack.c.l.b16 %v319
        %v352 = vunpack.c.l.b16 %v320
        %v353 = vunpack.c.l.b16 %v321
        %v354 = vunpack.c.l.b16 %v322
        %v355 = vunpack.c.l.b16 %v323
        %v356 = vpack.c.b16 %v341, %v340
        %v357 = vpack.c.b16 %v343, %v342
        %v358 = vpack.c.b16 %v345, %v344
        %v359 = vpack.c.b16 %v347, %v346
        %v360 = vpack.c.b16 %v349, %v348
        %v361 = vpack.c.b16 %v351, %v350
        %v362 = vpack.c.b16 %v353, %v352
        %v363 = vpack.c.b16 %v355, %v354
        %372 = vmatprep.subr.bf16.mxu0 0
        %373 = vmatpush1.bf16.msra.mxu0 %v356
        %374 = vmatprep.subr.bf16.mxu0 0
        %375 = vmatpush1.bf16.msra.mxu0 %v357
        %376 = vmatprep.subr.bf16.mxu0 0
        %377 = vmatpush1.bf16.msra.mxu0 %v358
        %378 = vmatprep.subr.bf16.mxu0 0
        %379 = vmatpush1.bf16.msra.mxu0 %v359
        %380 = vmatprep.subr.bf16.mxu0 0
        %381 = vmatpush1.bf16.msra.mxu0 %v360
        %382 = vmatprep.subr.bf16.mxu0 0
        %383 = vmatpush1.bf16.msra.mxu0 %v361
        %384 = vmatprep.subr.bf16.mxu0 0
        %385 = vmatpush1.bf16.msra.mxu0 %v362
        %386 = vmatprep.subr.bf16.mxu0 0
        %387 = vmatpush1.bf16.msra.mxu0 %v363
        %388 = vmatprep.subr.bf16.mxu0 0
        %389 = vmatpush1.bf16.msra.mxu0 0
        %390 = vmatprep.subr.bf16.mxu0 0
        %391 = vmatpush1.bf16.msra.mxu0 0
        %392 = vmatprep.subr.bf16.mxu0 0
        %393 = vmatpush1.bf16.msra.mxu0 0
        %394 = vmatprep.subr.bf16.mxu0 0
        %395 = vmatpush1.bf16.msra.mxu0 0
        %396 = vmatprep.subr.bf16.mxu0 0
        %397 = vmatpush1.bf16.msra.mxu0 0
        %398 = vmatprep.subr.bf16.mxu0 0
        %399 = vmatpush1.bf16.msra.mxu0 0
        %400 = vmatprep.subr.bf16.mxu0 0
        %401 = vmatpush1.bf16.msra.mxu0 0
        %402 = vmatprep.subr.bf16.mxu0 0
        %403 = vmatpush1.bf16.msra.mxu0 0
        %404 = vmatprep.mubr.bf16.mxu0 0
        %405 = vmatmul.mubr.bf16.gmra.mrb[0].mxu0 %v304
        %v406 = vpop.f32.mrb[0].mxu0
        %v407 = vadd.f32 0.0, %v406
        %v408 = vpop.f32.mrb[0].mxu0
        %v409 = vpop.f32.mrb[0].mxu0
        %v410 = vadd.f32 0.0, %v409
        %v411 = vpop.f32.mrb[0].mxu0
        %412 = vmatprep.mubr.bf16.mxu0 0
        %413 = vmatmul.mubr.bf16.gmra.mrb[0].mxu0 %v305
        %v414 = vpop.f32.mrb[0].mxu0
        %v415 = vadd.f32 0.0, %v414
        %v416 = vpop.f32.mrb[0].mxu0
        %v417 = vpop.f32.mrb[0].mxu0
        %v418 = vadd.f32 0.0, %v417
        %v419 = vpop.f32.mrb[0].mxu0
        %420 = vmatprep.mubr.bf16.mxu0 0
        %421 = vmatmul.mubr.bf16.gmra.mrb[0].mxu0 %v306
        %v422 = vpop.f32.mrb[0].mxu0
        %v423 = vadd.f32 0.0, %v422
        %v424 = vpop.f32.mrb[0].mxu0
        %v425 = vpop.f32.mrb[0].mxu0
        %v426 = vadd.f32 0.0, %v425
        %v427 = vpop.f32.mrb[0].mxu0
        %428 = vmatprep.mubr.bf16.mxu0 0
        %429 = vmatmul.mubr.bf16.gmra.mrb[0].mxu0 %v307
        %v430 = vpop.f32.mrb[0].mxu0
        %v431 = vadd.f32 0.0, %v430
        %v432 = vpop.f32.mrb[0].mxu0
        %v433 = vpop.f32.mrb[0].mxu0
        %v434 = vadd.f32 0.0, %v433
        %v435 = vpop.f32.mrb[0].mxu0
        %436 = vdwg.mxu0
        %v437 = vmul.f32 %v407, %v407
        %v438 = vmul.f32 %v410, %v410
        %v439 = vmul.f32 %v415, %v415
        %v440 = vmul.f32 %v418, %v418
        %v441 = vmul.f32 %v423, %v423
        %v442 = vmul.f32 %v426, %v426
        %v443 = vmul.f32 %v431, %v431
        %v444 = vmul.f32 %v434, %v434
        %445 = vadd.xlane.f32.xlu0 %v437
        %v446 = vpop.xlane.xlu0 %445
        %447 = vadd.xlane.f32.xlu0 %v438
        %v448 = vpop.xlane.xlu0 %447
        %449 = vadd.xlane.f32.xlu0 %v439
        %v450 = vpop.xlane.xlu0 %449
        %451 = vadd.xlane.f32.xlu0 %v440
        %v452 = vpop.xlane.xlu0 %451
        %453 = vadd.xlane.f32.xlu0 %v441
        %v454 = vpop.xlane.xlu0 %453
        %455 = vadd.xlane.f32.xlu0 %v442
        %v456 = vpop.xlane.xlu0 %455
        %457 = vadd.xlane.f32.xlu0 %v443
        %v458 = vpop.xlane.xlu0 %457
        %459 = vadd.xlane.f32.xlu0 %v444
        %v460 = vpop.xlane.xlu0 %459
        %v461 = vrsqrt.pop %v446
        %v462 = vmul.f32 %v446, %v461
        %vm463 = vcmp.eq.f32.partialorder %v446, inf
        %v464 = vsel %vm463, %v446, %v462
        %vm465 = vcmp.eq.f32.partialorder %v446, 0.0
        %v466 = vand.u32 %v446, 2147483648
        %v467 = vsel %vm465, %v466, %v464
        %v468 = vrsqrt.pop %v448
        %v469 = vmul.f32 %v448, %v468
        %vm470 = vcmp.eq.f32.partialorder %v448, inf
        %v471 = vsel %vm470, %v448, %v469
        %vm472 = vcmp.eq.f32.partialorder %v448, 0.0
        %v473 = vand.u32 %v448, 2147483648
        %v474 = vsel %vm472, %v473, %v471
        %v475 = vrsqrt.pop %v450
        %v476 = vmul.f32 %v450, %v475
        %vm477 = vcmp.eq.f32.partialorder %v450, inf
        %v478 = vsel %vm477, %v450, %v476
        %vm479 = vcmp.eq.f32.partialorder %v450, 0.0
        %v480 = vand.u32 %v450, 2147483648
        %v481 = vsel %vm479, %v480, %v478
        %v482 = vrsqrt.pop %v452
        %v483 = vmul.f32 %v452, %v482
        %vm484 = vcmp.eq.f32.partialorder %v452, inf
        %v485 = vsel %vm484, %v452, %v483
        %vm486 = vcmp.eq.f32.partialorder %v452, 0.0
        %v487 = vand.u32 %v452, 2147483648
        %v488 = vsel %vm486, %v487, %v485
        %v489 = vrsqrt.pop %v454
        %v490 = vmul.f32 %v454, %v489
        %vm491 = vcmp.eq.f32.partialorder %v454, inf
        %v492 = vsel %vm491, %v454, %v490
        %vm493 = vcmp.eq.f32.partialorder %v454, 0.0
        %v494 = vand.u32 %v454, 2147483648
        %v495 = vsel %vm493, %v494, %v492
        %v496 = vrsqrt.pop %v456
        %v497 = vmul.f32 %v456, %v496
        %vm498 = vcmp.eq.f32.partialorder %v456, inf
        %v499 = vsel %vm498, %v456, %v497
        %vm500 = vcmp.eq.f32.partialorder %v456, 0.0
        %v501 = vand.u32 %v456, 2147483648
        %v502 = vsel %vm500, %v501, %v499
        %v503 = vrsqrt.pop %v458
        %v504 = vmul.f32 %v458, %v503
        %vm505 = vcmp.eq.f32.partialorder %v458, inf
        %v506 = vsel %vm505, %v458, %v504
        %vm507 = vcmp.eq.f32.partialorder %v458, 0.0
        %v508 = vand.u32 %v458, 2147483648
        %v509 = vsel %vm507, %v508, %v506
        %v510 = vrsqrt.pop %v460
        %v511 = vmul.f32 %v460, %v510
        %vm512 = vcmp.eq.f32.partialorder %v460, inf
        %v513 = vsel %vm512, %v460, %v511
        %vm514 = vcmp.eq.f32.partialorder %v460, 0.0
        %v515 = vand.u32 %v460, 2147483648
        %v516 = vsel %vm514, %v515, %v513
        %v517 = vmax.f32 %v467, 1e-15
        %v518 = vmax.f32 %v474, 1e-15
        %v519 = vmax.f32 %v481, 1e-15
        %v520 = vmax.f32 %v488, 1e-15
        %v521 = vmax.f32 %v495, 1e-15
        %v522 = vmax.f32 %v502, 1e-15
        %v523 = vmax.f32 %v509, 1e-15
        %v524 = vmax.f32 %v516, 1e-15
        %v525 = vrcp.pop %v296
        %v526 = vrcp.pop %v297
        %v527 = vrcp.pop %v298
        %v528 = vrcp.pop %v299
        %v529 = vrcp.pop %v300
        %v530 = vrcp.pop %v301
        %v531 = vrcp.pop %v302
        %v532 = vrcp.pop %v303
        %v533 = vmul.f32 %v517, %v525
        %v534 = vmul.f32 %v518, %v526
        %v535 = vmul.f32 %v519, %v527
        %v536 = vmul.f32 %v520, %v528
        %v537 = vmul.f32 %v521, %v529
        %v538 = vmul.f32 %v522, %v530
        %v539 = vmul.f32 %v523, %v531
        %v540 = vmul.f32 %v524, %v532
        %v541 = vmax.f32 %v296, -0.9999999
        %v542 = vmax.f32 %v297, -0.9999999
        %v543 = vmax.f32 %v298, -0.9999999
        %v544 = vmax.f32 %v299, -0.9999999
        %v545 = vmax.f32 %v300, -0.9999999
        %v546 = vmax.f32 %v301, -0.9999999
        %v547 = vmax.f32 %v302, -0.9999999
        %v548 = vmax.f32 %v303, -0.9999999
        %v549 = vmin.f32 %v541, 0.9999999
        %v550 = vmin.f32 %v542, 0.9999999
        %v551 = vmin.f32 %v543, 0.9999999
        %v552 = vmin.f32 %v544, 0.9999999
        %v553 = vmin.f32 %v545, 0.9999999
        %v554 = vmin.f32 %v546, 0.9999999
        %v555 = vmin.f32 %v547, 0.9999999
        %v556 = vmin.f32 %v548, 0.9999999
        %v557 = vadd.f32 %v549, 1.0
        %v558 = vadd.f32 %v550, 1.0
        %v559 = vadd.f32 %v551, 1.0
        %v560 = vadd.f32 %v552, 1.0
        %v561 = vadd.f32 %v553, 1.0
        %v562 = vadd.f32 %v554, 1.0
        %v563 = vadd.f32 %v555, 1.0
        %v564 = vadd.f32 %v556, 1.0
        %v565 = vsub.f32 1.0, %v549
        %v566 = vsub.f32 1.0, %v550
        %v567 = vsub.f32 1.0, %v551
        %v568 = vsub.f32 1.0, %v552
        %v569 = vsub.f32 1.0, %v553
        %v570 = vsub.f32 1.0, %v554
        %v571 = vsub.f32 1.0, %v555
        %v572 = vsub.f32 1.0, %v556
        %v573 = vrcp.pop %v565
        %v574 = vmul.f32 %v557, %v573
        %v575 = vrcp.pop %v566
        %v576 = vmul.f32 %v558, %v575
        %v577 = vrcp.pop %v567
        %v578 = vmul.f32 %v559, %v577
        %v579 = vrcp.pop %v568
        %v580 = vmul.f32 %v560, %v579
        %v581 = vrcp.pop %v569
        %v582 = vmul.f32 %v561, %v581
        %v583 = vrcp.pop %v570
        %v584 = vmul.f32 %v562, %v583
        %v585 = vrcp.pop %v571
        %v586 = vmul.f32 %v563, %v585
        %v587 = vrcp.pop %v572
        %v588 = vmul.f32 %v564, %v587
        %v589 = vlog2.pop %v574
        %v590 = vmul.f32 %v589, 0.6931472
        %v591 = vlog2.pop %v576
        %v592 = vmul.f32 %v591, 0.6931472
        %v593 = vlog2.pop %v578
        %v594 = vmul.f32 %v593, 0.6931472
        %v595 = vlog2.pop %v580
        %v596 = vmul.f32 %v595, 0.6931472
        %v597 = vlog2.pop %v582
        %v598 = vmul.f32 %v597, 0.6931472
        %v599 = vlog2.pop %v584
        %v600 = vmul.f32 %v599, 0.6931472
        %v601 = vlog2.pop %v586
        %v602 = vmul.f32 %v601, 0.6931472
        %v603 = vlog2.pop %v588
        %v604 = vmul.f32 %v603, 0.6931472
        %v605 = vmul.f32 %v590, 0.5
        %v606 = vmul.f32 %v592, 0.5
        %v607 = vmul.f32 %v594, 0.5
        %v608 = vmul.f32 %v596, 0.5
        %v609 = vmul.f32 %v598, 0.5
        %v610 = vmul.f32 %v600, 0.5
        %v611 = vmul.f32 %v602, 0.5
        %v612 = vmul.f32 %v604, 0.5
        %v613 = vmul.f32 %v533, %v605
        %v614 = vmul.f32 %v534, %v606
        %v615 = vmul.f32 %v535, %v607
        %v616 = vmul.f32 %v536, %v608
        %v617 = vmul.f32 %v537, %v609
        %v618 = vmul.f32 %v538, %v610
        %v619 = vmul.f32 %v539, %v611
        %v620 = vmul.f32 %v540, %v612
        %v621 = vtanh.pop %v613
        %v622 = vtanh.pop %v614
        %v623 = vtanh.pop %v615
        %v624 = vtanh.pop %v616
        %v625 = vtanh.pop %v617
        %v626 = vtanh.pop %v618
        %v627 = vtanh.pop %v619
        %v628 = vtanh.pop %v620
        %v629 = vmin.f32 %v621, 0.996
        %v630 = vmin.f32 %v622, 0.996
        %v631 = vmin.f32 %v623, 0.996
        %v632 = vmin.f32 %v624, 0.996
        %v633 = vmin.f32 %v625, 0.996
        %v634 = vmin.f32 %v626, 0.996
        %v635 = vmin.f32 %v627, 0.996
        %v636 = vmin.f32 %v628, 0.996
        %vm637 = vcmp.le.f32.partialorder %v517, 1e-15
        %vm638 = vcmp.le.f32.partialorder %v518, 1e-15
        %vm639 = vcmp.le.f32.partialorder %v519, 1e-15
        %vm640 = vcmp.le.f32.partialorder %v520, 1e-15
        %vm641 = vcmp.le.f32.partialorder %v521, 1e-15
        %vm642 = vcmp.le.f32.partialorder %v522, 1e-15
        %vm643 = vcmp.le.f32.partialorder %v523, 1e-15
        %vm644 = vcmp.le.f32.partialorder %v524, 1e-15
        %v645 = vrcp.pop %v517
        %v646 = vrcp.pop %v518
        %v647 = vrcp.pop %v519
        %v648 = vrcp.pop %v520
        %v649 = vrcp.pop %v521
        %v650 = vrcp.pop %v522
        %v651 = vrcp.pop %v523
        %v652 = vrcp.pop %v524
        %v653 = vmul.f32 %v629, %v645
        %v654 = vmul.f32 %v630, %v646
        %v655 = vmul.f32 %v631, %v647
        %v656 = vmul.f32 %v632, %v648
        %v657 = vmul.f32 %v633, %v649
        %v658 = vmul.f32 %v634, %v650
        %v659 = vmul.f32 %v635, %v651
        %v660 = vmul.f32 %v636, %v652
        %v661 = vsel %vm637, 0.0, %v653
        %v662 = vsel %vm638, 0.0, %v654
        %v663 = vsel %vm639, 0.0, %v655
        %v664 = vsel %vm640, 0.0, %v656
        %v665 = vsel %vm641, 0.0, %v657
        %v666 = vsel %vm642, 0.0, %v658
        %v667 = vsel %vm643, 0.0, %v659
        %v668 = vsel %vm644, 0.0, %v660
        %v669 = vmul.f32 %v661, %v407
        %v670 = vmul.f32 %v662, %v410
        %v671 = vmul.f32 %v663, %v415
        %v672 = vmul.f32 %v664, %v418
        %v673 = vmul.f32 %v665, %v423
        %v674 = vmul.f32 %v666, %v426
        %v675 = vmul.f32 %v667, %v431
        %v676 = vmul.f32 %v668, %v434
        %v677 = vmul.f32 %v629, %v629
        %v678 = vmul.f32 %v630, %v630
        %v679 = vmul.f32 %v631, %v631
        %v680 = vmul.f32 %v632, %v632
        %v681 = vmul.f32 %v633, %v633
        %v682 = vmul.f32 %v634, %v634
        %v683 = vmul.f32 %v635, %v635
        %v684 = vmul.f32 %v636, %v636
        %v685 = vsel %vm637, 0.0, %v677
        %v686 = vsel %vm638, 0.0, %v678
        %v687 = vsel %vm639, 0.0, %v679
        %v688 = vsel %vm640, 0.0, %v680
        %v689 = vsel %vm641, 0.0, %v681
        %v690 = vsel %vm642, 0.0, %v682
        %v691 = vsel %vm643, 0.0, %v683
        %v692 = vsel %vm644, 0.0, %v684
        %v693 = vmul.f32 %v215, %v215
        %vm694 = vcmask 1040384
        %v695 = vsel %vm694, %v693, 0.0
        %696 = vadd.xlane.f32.xlu0 %v695
        %v697 = vpop.xlane.xlu0 %696
        %v699 = vlaneseq
        %v700 = vshrl.u32 %v699, 7
        %v701 = vsub.s32 0, %v700
        %v702 = vrot.slane %v215, %v701
        %v704 = vmul.f32 %v669, %v702
        %v705 = vmul.f32 %v670, %v702
        %v706 = vmul.f32 %v671, %v702
        %v707 = vmul.f32 %v672, %v702
        %v708 = vmul.f32 %v673, %v702
        %v709 = vmul.f32 %v674, %v702
        %v710 = vmul.f32 %v675, %v702
        %v711 = vmul.f32 %v676, %v702
        %712 = vadd.xlane.f32.xlu0 %v704
        %v713 = vpop.xlane.xlu0 %712
        %714 = vadd.xlane.f32.xlu0 %v705
        %v715 = vpop.xlane.xlu0 %714
        %716 = vadd.xlane.f32.xlu0 %v706
        %v717 = vpop.xlane.xlu0 %716
        %718 = vadd.xlane.f32.xlu0 %v707
        %v719 = vpop.xlane.xlu0 %718
        %720 = vadd.xlane.f32.xlu0 %v708
        %v721 = vpop.xlane.xlu0 %720
        %722 = vadd.xlane.f32.xlu0 %v709
        %v723 = vpop.xlane.xlu0 %722
        %724 = vadd.xlane.f32.xlu0 %v710
        %v725 = vpop.xlane.xlu0 %724
        %726 = vadd.xlane.f32.xlu0 %v711
        %v727 = vpop.xlane.xlu0 %726
        %v728 = vmul.f32 %v713, 2.0
        %v729 = vmul.f32 %v715, 2.0
        %v730 = vmul.f32 %v717, 2.0
        %v731 = vmul.f32 %v719, 2.0
        %v732 = vmul.f32 %v721, 2.0
        %v733 = vmul.f32 %v723, 2.0
        %v734 = vmul.f32 %v725, 2.0
        %v735 = vmul.f32 %v727, 2.0
        %v736 = vadd.f32 %v728, 1.0
        %v737 = vadd.f32 %v729, 1.0
        %v738 = vadd.f32 %v730, 1.0
        %v739 = vadd.f32 %v731, 1.0
        %v740 = vadd.f32 %v732, 1.0
        %v741 = vadd.f32 %v733, 1.0
        %v742 = vadd.f32 %v734, 1.0
        %v743 = vadd.f32 %v735, 1.0
        %v744 = vlaneseq
        %v745 = vshrl.u32 %v744, 7
        %v746 = vsub.s32 0, %v745
        %v747 = vrot.slane %v697, %v746
        %v748 = vadd.f32 %v736, %v747
        %v749 = vadd.f32 %v737, %v747
        %v750 = vadd.f32 %v738, %v747
        %v751 = vadd.f32 %v739, %v747
        %v752 = vadd.f32 %v740, %v747
        %v753 = vadd.f32 %v741, %v747
        %v754 = vadd.f32 %v742, %v747
        %v755 = vadd.f32 %v743, %v747
        %v756 = vmul.f32 %v748, %v669
        %v757 = vmul.f32 %v749, %v670
        %v758 = vmul.f32 %v750, %v671
        %v759 = vmul.f32 %v751, %v672
        %v760 = vmul.f32 %v752, %v673
        %v761 = vmul.f32 %v753, %v674
        %v762 = vmul.f32 %v754, %v675
        %v763 = vmul.f32 %v755, %v676
        %v764 = vsub.f32 1.0, %v685
        %v765 = vsub.f32 1.0, %v686
        %v766 = vsub.f32 1.0, %v687
        %v767 = vsub.f32 1.0, %v688
        %v768 = vsub.f32 1.0, %v689
        %v769 = vsub.f32 1.0, %v690
        %v770 = vsub.f32 1.0, %v691
        %v771 = vsub.f32 1.0, %v692
        %v772 = vmul.f32 %v764, %v702
        %v773 = vmul.f32 %v765, %v702
        %v774 = vmul.f32 %v766, %v702
        %v775 = vmul.f32 %v767, %v702
        %v776 = vmul.f32 %v768, %v702
        %v777 = vmul.f32 %v769, %v702
        %v778 = vmul.f32 %v770, %v702
        %v779 = vmul.f32 %v771, %v702
        %v780 = vadd.f32 %v756, %v772
        %v781 = vadd.f32 %v757, %v773
        %v782 = vadd.f32 %v758, %v774
        %v783 = vadd.f32 %v759, %v775
        %v784 = vadd.f32 %v760, %v776
        %v785 = vadd.f32 %v761, %v777
        %v786 = vadd.f32 %v762, %v778
        %v787 = vadd.f32 %v763, %v779
        %v788 = vmul.f32 %v685, %v747
        %v789 = vmul.f32 %v686, %v747
        %v790 = vmul.f32 %v687, %v747
        %v791 = vmul.f32 %v688, %v747
        %v792 = vmul.f32 %v689, %v747
        %v793 = vmul.f32 %v690, %v747
        %v794 = vmul.f32 %v691, %v747
        %v795 = vmul.f32 %v692, %v747
        %v796 = vadd.f32 %v736, %v788
        %v797 = vadd.f32 %v737, %v789
        %v798 = vadd.f32 %v738, %v790
        %v799 = vadd.f32 %v739, %v791
        %v800 = vadd.f32 %v740, %v792
        %v801 = vadd.f32 %v741, %v793
        %v802 = vadd.f32 %v742, %v794
        %v803 = vadd.f32 %v743, %v795
        %v804 = vmax.f32 %v796, 1e-15
        %v805 = vmax.f32 %v797, 1e-15
        %v806 = vmax.f32 %v798, 1e-15
        %v807 = vmax.f32 %v799, 1e-15
        %v808 = vmax.f32 %v800, 1e-15
        %v809 = vmax.f32 %v801, 1e-15
        %v810 = vmax.f32 %v802, 1e-15
        %v811 = vmax.f32 %v803, 1e-15
        %v812 = vrcp.pop %v804
        %v813 = vmul.f32 1.0, %v812
        %v814 = vrcp.pop %v805
        %v815 = vmul.f32 1.0, %v814
        %v816 = vrcp.pop %v806
        %v817 = vmul.f32 1.0, %v816
        %v818 = vrcp.pop %v807
        %v819 = vmul.f32 1.0, %v818
        %v820 = vrcp.pop %v808
        %v821 = vmul.f32 1.0, %v820
        %v822 = vrcp.pop %v809
        %v823 = vmul.f32 1.0, %v822
        %v824 = vrcp.pop %v810
        %v825 = vmul.f32 1.0, %v824
        %v826 = vrcp.pop %v811
        %v827 = vmul.f32 1.0, %v826
        %v828 = vmul.f32 %v780, %v813
        %v829 = vmul.f32 %v781, %v815
        %v830 = vmul.f32 %v782, %v817
        %v831 = vmul.f32 %v783, %v819
        %v832 = vmul.f32 %v784, %v821
        %v833 = vmul.f32 %v785, %v823
        %v834 = vmul.f32 %v786, %v825
        %v835 = vmul.f32 %v787, %v827
        %v836 = vmul.f32 %v828, %v828
        %v837 = vmul.f32 %v829, %v829
        %v838 = vmul.f32 %v830, %v830
        %v839 = vmul.f32 %v831, %v831
        %v840 = vmul.f32 %v832, %v832
        %v841 = vmul.f32 %v833, %v833
        %v842 = vmul.f32 %v834, %v834
        %v843 = vmul.f32 %v835, %v835
        %844 = vadd.xlane.f32.xlu0 %v836
        %v845 = vpop.xlane.xlu0 %844
        %846 = vadd.xlane.f32.xlu0 %v837
        %v847 = vpop.xlane.xlu0 %846
        %848 = vadd.xlane.f32.xlu0 %v838
        %v849 = vpop.xlane.xlu0 %848
        %850 = vadd.xlane.f32.xlu0 %v839
        %v851 = vpop.xlane.xlu0 %850
        %852 = vadd.xlane.f32.xlu0 %v840
        %v853 = vpop.xlane.xlu0 %852
        %854 = vadd.xlane.f32.xlu0 %v841
        %v855 = vpop.xlane.xlu0 %854
        %856 = vadd.xlane.f32.xlu0 %v842
        %v857 = vpop.xlane.xlu0 %856
        %858 = vadd.xlane.f32.xlu0 %v843
        %v859 = vpop.xlane.xlu0 %858
        %v860 = vrsqrt.pop %v845
        %v861 = vmul.f32 %v845, %v860
        %vm862 = vcmp.eq.f32.partialorder %v845, inf
        %v863 = vsel %vm862, %v845, %v861
        %vm864 = vcmp.eq.f32.partialorder %v845, 0.0
        %v865 = vand.u32 %v845, 2147483648
        %v866 = vsel %vm864, %v865, %v863
        %v867 = vrsqrt.pop %v847
        %v868 = vmul.f32 %v847, %v867
        %vm869 = vcmp.eq.f32.partialorder %v847, inf
        %v870 = vsel %vm869, %v847, %v868
        %vm871 = vcmp.eq.f32.partialorder %v847, 0.0
        %v872 = vand.u32 %v847, 2147483648
        %v873 = vsel %vm871, %v872, %v870
        %v874 = vrsqrt.pop %v849
        %v875 = vmul.f32 %v849, %v874
        %vm876 = vcmp.eq.f32.partialorder %v849, inf
        %v877 = vsel %vm876, %v849, %v875
        %vm878 = vcmp.eq.f32.partialorder %v849, 0.0
        %v879 = vand.u32 %v849, 2147483648
        %v880 = vsel %vm878, %v879, %v877
        %v881 = vrsqrt.pop %v851
        %v882 = vmul.f32 %v851, %v881
        %vm883 = vcmp.eq.f32.partialorder %v851, inf
        %v884 = vsel %vm883, %v851, %v882
        %vm885 = vcmp.eq.f32.partialorder %v851, 0.0
        %v886 = vand.u32 %v851, 2147483648
        %v887 = vsel %vm885, %v886, %v884
        %v888 = vrsqrt.pop %v853
        %v889 = vmul.f32 %v853, %v888
        %vm890 = vcmp.eq.f32.partialorder %v853, inf
        %v891 = vsel %vm890, %v853, %v889
        %vm892 = vcmp.eq.f32.partialorder %v853, 0.0
        %v893 = vand.u32 %v853, 2147483648
        %v894 = vsel %vm892, %v893, %v891
        %v895 = vrsqrt.pop %v855
        %v896 = vmul.f32 %v855, %v895
        %vm897 = vcmp.eq.f32.partialorder %v855, inf
        %v898 = vsel %vm897, %v855, %v896
        %vm899 = vcmp.eq.f32.partialorder %v855, 0.0
        %v900 = vand.u32 %v855, 2147483648
        %v901 = vsel %vm899, %v900, %v898
        %v902 = vrsqrt.pop %v857
        %v903 = vmul.f32 %v857, %v902
        %vm904 = vcmp.eq.f32.partialorder %v857, inf
        %v905 = vsel %vm904, %v857, %v903
        %vm906 = vcmp.eq.f32.partialorder %v857, 0.0
        %v907 = vand.u32 %v857, 2147483648
        %v908 = vsel %vm906, %v907, %v905
        %v909 = vrsqrt.pop %v859
        %v910 = vmul.f32 %v859, %v909
        %vm911 = vcmp.eq.f32.partialorder %v859, inf
        %v912 = vsel %vm911, %v859, %v910
        %vm913 = vcmp.eq.f32.partialorder %v859, 0.0
        %v914 = vand.u32 %v859, 2147483648
        %v915 = vsel %vm913, %v914, %v912
        %v916 = vmax.f32 %v866, 1e-15
        %v917 = vmax.f32 %v873, 1e-15
        %v918 = vmax.f32 %v880, 1e-15
        %v919 = vmax.f32 %v887, 1e-15
        %v920 = vmax.f32 %v894, 1e-15
        %v921 = vmax.f32 %v901, 1e-15
        %v922 = vmax.f32 %v908, 1e-15
        %v923 = vmax.f32 %v915, 1e-15
        %vm924 = vcmp.gt.f32.partialorder %v916, 0.996
        %vm925 = vcmp.gt.f32.partialorder %v917, 0.996
        %vm926 = vcmp.gt.f32.partialorder %v918, 0.996
        %vm927 = vcmp.gt.f32.partialorder %v919, 0.996
        %vm928 = vcmp.gt.f32.partialorder %v920, 0.996
        %vm929 = vcmp.gt.f32.partialorder %v921, 0.996
        %vm930 = vcmp.gt.f32.partialorder %v922, 0.996
        %vm931 = vcmp.gt.f32.partialorder %v923, 0.996
        %v932 = vrcp.pop %v916
        %v933 = vrcp.pop %v917
        %v934 = vrcp.pop %v918
        %v935 = vrcp.pop %v919
        %v936 = vrcp.pop %v920
        %v937 = vrcp.pop %v921
        %v938 = vrcp.pop %v922
        %v939 = vrcp.pop %v923
        %v940 = vmul.f32 %v932, 0.996
        %v941 = vmul.f32 %v933, 0.996
        %v942 = vmul.f32 %v934, 0.996
        %v943 = vmul.f32 %v935, 0.996
        %v944 = vmul.f32 %v936, 0.996
        %v945 = vmul.f32 %v937, 0.996
        %v946 = vmul.f32 %v938, 0.996
        %v947 = vmul.f32 %v939, 0.996
        %v948 = vmul.f32 %v828, %v940
        %v949 = vmul.f32 %v829, %v941
        %v950 = vmul.f32 %v830, %v942
        %v951 = vmul.f32 %v831, %v943
        %v952 = vmul.f32 %v832, %v944
        %v953 = vmul.f32 %v833, %v945
        %v954 = vmul.f32 %v834, %v946
        %v955 = vmul.f32 %v835, %v947
        %v956 = vsel %vm924, 1, 0
        %v957 = vsel %vm925, 1, 0
        %v958 = vsel %vm926, 1, 0
        %v959 = vsel %vm927, 1, 0
        %v960 = vsel %vm928, 1, 0
        %v961 = vsel %vm929, 1, 0
        %v962 = vsel %vm930, 1, 0
        %v963 = vsel %vm931, 1, 0
        %vm964 = vcmp.eq.s32.totalorder %v956, 1
        %vm965 = vcmp.eq.s32.totalorder %v957, 1
        %vm966 = vcmp.eq.s32.totalorder %v958, 1
        %vm967 = vcmp.eq.s32.totalorder %v959, 1
        %vm968 = vcmp.eq.s32.totalorder %v960, 1
        %vm969 = vcmp.eq.s32.totalorder %v961, 1
        %vm970 = vcmp.eq.s32.totalorder %v962, 1
        %vm971 = vcmp.eq.s32.totalorder %v963, 1
        %v972 = vsel %vm964, %v948, %v828
        %v973 = vsel %vm965, %v949, %v829
        %v974 = vsel %vm966, %v950, %v830
        %v975 = vsel %vm967, %v951, %v831
        %v976 = vsel %vm968, %v952, %v832
        %v977 = vsel %vm969, %v953, %v833
        %v978 = vsel %vm970, %v954, %v834
        %v979 = vsel %vm971, %v955, %v835
        %v980 = vmin.f32 %v916, 0.996
        %v981 = vmin.f32 %v917, 0.996
        %v982 = vmin.f32 %v918, 0.996
        %v983 = vmin.f32 %v919, 0.996
        %v984 = vmin.f32 %v920, 0.996
        %v985 = vmin.f32 %v921, 0.996
        %v986 = vmin.f32 %v922, 0.996
        %v987 = vmin.f32 %v923, 0.996
        %v988 = vmax.f32 %v980, -0.9999999
        %v989 = vmax.f32 %v981, -0.9999999
        %v990 = vmax.f32 %v982, -0.9999999
        %v991 = vmax.f32 %v983, -0.9999999
        %v992 = vmax.f32 %v984, -0.9999999
        %v993 = vmax.f32 %v985, -0.9999999
        %v994 = vmax.f32 %v986, -0.9999999
        %v995 = vmax.f32 %v987, -0.9999999
        %v996 = vmin.f32 %v988, 0.9999999
        %v997 = vmin.f32 %v989, 0.9999999
        %v998 = vmin.f32 %v990, 0.9999999
        %v999 = vmin.f32 %v991, 0.9999999
        %v1000 = vmin.f32 %v992, 0.9999999
        %v1001 = vmin.f32 %v993, 0.9999999
        %v1002 = vmin.f32 %v994, 0.9999999
        %v1003 = vmin.f32 %v995, 0.9999999
        %v1004 = vadd.f32 %v996, 1.0
        %v1005 = vadd.f32 %v997, 1.0
        %v1006 = vadd.f32 %v998, 1.0
        %v1007 = vadd.f32 %v999, 1.0
        %v1008 = vadd.f32 %v1000, 1.0
        %v1009 = vadd.f32 %v1001, 1.0
        %v1010 = vadd.f32 %v1002, 1.0
        %v1011 = vadd.f32 %v1003, 1.0
        %v1012 = vsub.f32 1.0, %v996
        %v1013 = vsub.f32 1.0, %v997
        %v1014 = vsub.f32 1.0, %v998
        %v1015 = vsub.f32 1.0, %v999
        %v1016 = vsub.f32 1.0, %v1000
        %v1017 = vsub.f32 1.0, %v1001
        %v1018 = vsub.f32 1.0, %v1002
        %v1019 = vsub.f32 1.0, %v1003
        %v1020 = vrcp.pop %v1012
        %v1021 = vmul.f32 %v1004, %v1020
        %v1022 = vrcp.pop %v1013
        %v1023 = vmul.f32 %v1005, %v1022
        %v1024 = vrcp.pop %v1014
        %v1025 = vmul.f32 %v1006, %v1024
        %v1026 = vrcp.pop %v1015
        %v1027 = vmul.f32 %v1007, %v1026
        %v1028 = vrcp.pop %v1016
        %v1029 = vmul.f32 %v1008, %v1028
        %v1030 = vrcp.pop %v1017
        %v1031 = vmul.f32 %v1009, %v1030
        %v1032 = vrcp.pop %v1018
        %v1033 = vmul.f32 %v1010, %v1032
        %v1034 = vrcp.pop %v1019
        %v1035 = vmul.f32 %v1011, %v1034
        %v1036 = vlog2.pop %v1021
        %v1037 = vmul.f32 %v1036, 0.6931472
        %v1038 = vlog2.pop %v1023
        %v1039 = vmul.f32 %v1038, 0.6931472
        %v1040 = vlog2.pop %v1025
        %v1041 = vmul.f32 %v1040, 0.6931472
        %v1042 = vlog2.pop %v1027
        %v1043 = vmul.f32 %v1042, 0.6931472
        %v1044 = vlog2.pop %v1029
        %v1045 = vmul.f32 %v1044, 0.6931472
        %v1046 = vlog2.pop %v1031
        %v1047 = vmul.f32 %v1046, 0.6931472
        %v1048 = vlog2.pop %v1033
        %v1049 = vmul.f32 %v1048, 0.6931472
        %v1050 = vlog2.pop %v1035
        %v1051 = vmul.f32 %v1050, 0.6931472
        %v1052 = vmul.f32 %v1037, 0.5
        %v1053 = vmul.f32 %v1039, 0.5
        %v1054 = vmul.f32 %v1041, 0.5
        %v1055 = vmul.f32 %v1043, 0.5
        %v1056 = vmul.f32 %v1045, 0.5
        %v1057 = vmul.f32 %v1047, 0.5
        %v1058 = vmul.f32 %v1049, 0.5
        %v1059 = vmul.f32 %v1051, 0.5
        %v1060 = vrcp.pop %v980
        %v1061 = vmul.f32 %v1052, %v1060
        %v1062 = vrcp.pop %v981
        %v1063 = vmul.f32 %v1053, %v1062
        %v1064 = vrcp.pop %v982
        %v1065 = vmul.f32 %v1054, %v1064
        %v1066 = vrcp.pop %v983
        %v1067 = vmul.f32 %v1055, %v1066
        %v1068 = vrcp.pop %v984
        %v1069 = vmul.f32 %v1056, %v1068
        %v1070 = vrcp.pop %v985
        %v1071 = vmul.f32 %v1057, %v1070
        %v1072 = vrcp.pop %v986
        %v1073 = vmul.f32 %v1058, %v1072
        %v1074 = vrcp.pop %v987
        %v1075 = vmul.f32 %v1059, %v1074
        %v1076 = vmul.f32 %v1061, %v972
        %v1077 = vmul.f32 %v1063, %v973
        %v1078 = vmul.f32 %v1065, %v974
        %v1079 = vmul.f32 %v1067, %v975
        %v1080 = vmul.f32 %v1069, %v976
        %v1081 = vmul.f32 %v1071, %v977
        %v1082 = vmul.f32 %v1073, %v978
        %v1083 = vmul.f32 %v1075, %v979
        %v1084 = vpack.c.bf16 %v1077, %v1076
        %v1085 = vpack.c.bf16 %v1079, %v1078
        %v1086 = vpack.c.bf16 %v1081, %v1080
        %v1087 = vpack.c.bf16 %v1083, %v1082
        %v1092 = vunpack.c.l.b16 %v1084
        %v1093 = vunpack.c.h.b16 %v1084
        %v1094 = vunpack.c.l.b16 %v1085
        %v1095 = vunpack.c.h.b16 %v1085
        %v1096 = vunpack.c.l.b16 %v1086
        %v1097 = vunpack.c.h.b16 %v1086
        %v1098 = vunpack.c.l.b16 %v1087
        %v1099 = vunpack.c.h.b16 %v1087
        %v1100 = vpack.c.b16 %v1092, %v1092
        %v1101 = vpack.c.b16 %v1093, %v1093
        %v1102 = vpack.c.b16 %v1094, %v1094
        %v1103 = vpack.c.b16 %v1095, %v1095
        %v1104 = vpack.c.b16 %v1096, %v1096
        %v1105 = vpack.c.b16 %v1097, %v1097
        %v1106 = vpack.c.b16 %v1098, %v1098
        %v1107 = vpack.c.b16 %v1099, %v1099
        %1116 = vst [vmem:[%s203] sm:$0xf] %v1100
        %1117 = vst [vmem:[%s203 + $0x4] sm:$0xf] %v1101
        %1118 = vst [vmem:[%s203 + $0x8] sm:$0xf] %v1102
        %1119 = vst [vmem:[%s203 + $0xc] sm:$0xf] %v1103
        %1120 = vst [vmem:[%s203 + $0x10] sm:$0xf] %v1104
        %1121 = vst [vmem:[%s203 + $0x14] sm:$0xf] %v1105
        %1122 = vst [vmem:[%s203 + $0x18] sm:$0xf] %v1106
        %1123 = vst [vmem:[%s203 + $0x1c] sm:$0xf] %v1107
        %s1124 = sand.u32 %s97, 1
        %s1125 = scalar_lea.sflag [#allocation4], %s1124
        %s1126 = sand.u32 %s97, 1
        %s1127 = smul.addr %s1126, 32
        %s1128 = scalar_lea.vmem [#allocation7], %s1127
        // Predicated region
        $region41: #{tpu_custom_call.1} parent=31 // pred_check
          %p1129 = pneg %p107
        $region42: #{tpu_custom_call.1} parent=31 // pred_check_branch
          %1131 = sbr.rel (%p1129) target = $region44
        $region43: #{tpu_custom_call.1} parent=31 // pred_region
          %s1132 = smul.u32 8, %s21
          %s1134 = ssub.s32 512, 512
          %1135 = vsyncadd %s1125, %s1134
          %s1136 = smul.addr %s1132, 64
          %s1137 = scalar_lea.hbm %s3, %s1136
          %s1138 = sshll.u32 %s1128, 4
          %s1139 = int_to_ptr.vmem [resolvable:$true] %s1138
          %1144 = dma.vmem_to_hbm [thread:$0]  %s1139, 512, %s1137, %s1125, 64, 64, 4
        $region44: #{tpu_custom_call.1} parent=31 // pred_fallthru
          _
      $region32: #{tpu_custom_call.1} parent=5 // pred_fallthru
        _
      %p1145 = scmp.le.s32.totalorder 2, %s16
      // Predicated region
      $region45: #{tpu_custom_call.1} parent=5 // pred_check
        %p1146 = pneg %p1145
      $region46: #{tpu_custom_call.1} parent=5 // pred_check_branch
        %1148 = sbr.rel (%p1146) target = $region48
      $region47: #{tpu_custom_call.1} parent=5 // pred_region
        %s1149 = ssub.s32 %s16, 2
        // Predicated region
        $region49: #{tpu_custom_call.1} parent=47 // pred_check
          %p1150 = pneg %p113
        $region50: #{tpu_custom_call.1} parent=47 // pred_check_branch
          %1152 = sbr.rel (%p1150) target = $region52
        $region51: #{tpu_custom_call.1} parent=47 // pred_region
          %s1153 = sand.u32 %s98, 1
          %s1154 = scalar_lea.sflag [#allocation4], %s1153
          %s1155 = sand.u32 %s98, 1
          %s1156 = smul.addr %s1155, 32
          %s1157 = scalar_lea.vmem [#allocation7], %s1156
          %1158 = dma.done %s1154, 512
        $region52: #{tpu_custom_call.1} parent=47 // pred_fallthru
          _
      $region48: #{tpu_custom_call.1} parent=5 // pred_fallthru
        _
    $region6: #{tpu_custom_call.1} parent=1 // loop_footer
      %s20 = sadd.s32 1, %s16
    $region7: #{tpu_custom_call.1} parent=1 // loop_footer_branch
      %15 = sbr.rel target = $region3
    $region8: #{tpu_custom_call.1} parent=1 // loop_exit
      _
    %1159 = vsyncpa [#allocation3], 1
    %s1160 = scalar_lea.sflag [#allocation3], 1
    %1161 = vsyncpa %s1160, 1
    %1162 = vsyncpa [#allocation6], 1
    %1163 = vsyncpa [#allocation4], 1
    %s1164 = scalar_lea.sflag [#allocation4], 1
    %1165 = vsyncpa %s1164, 1

</llo_original>
